<compile_context>
chip_gen: v7x
topology: tpu7x:2x2x1
jax: 0.10.0
libtpu: 0.0.40
codegen_flags: <defaults>
</compile_context>

<pallas_src>
import jax
import jax.numpy as jnp
from jax.experimental import pallas as pl
from jax.experimental.pallas import tpu as pltpu

_IGNORE_INDEX = -100     # PyTorch nn.CrossEntropyLoss default
_LANE = 128
_MAX_TILE = 32768        # lane cap per grid step (~1.7 MiB/step for C=4, K=8 f32)
_MIN_TILE = 4096         # smallest "nice" tile when searching exact divisors
_TARGET_LANES = 16384    # per-step lane target used when batching small images
_MAX_BN = 16             # cap on images per block (keeps unrolled loop small)


def _full_model_kernel(x_ref, w_ref, b_ref, lab_ref,
                       logits_ref, part_ref,
                       acc_nll_ref, acc_cnt_ref):
    """One (image-block nb, pixel-tile t) step.

    x_ref      : [Bn, C, T]  f32  input pixels (NCHW view, T lanes of pixels)
    w_ref      : [K, C]      f32  1x1-conv weight (resident)
    b_ref      : [K, 1]      f32  bias, broadcast along lanes (resident)
    lab_ref    : [Bn, 1, T]  i32  class id per pixel (-100 = ignore)
    logits_ref : [Bn, K, T]  f32  output logits (lane-dense)
    part_ref   : [1, 2, 128] f32  per-image-block [nll_sum, valid_count]
    acc_*_ref  : [1, T]      f32  full-tile VMEM accumulators (VALU adds only)
    """
    t = pl.program_id(1)
    n_tiles = pl.num_programs(1)

    @pl.when(t == 0)
    def _init():
        acc_nll_ref[...] = jnp.zeros_like(acc_nll_ref)
        acc_cnt_ref[...] = jnp.zeros_like(acc_cnt_ref)

    w = w_ref[...]        # [K, C]
    bias_col = b_ref[...] # [K, 1]
    bn = x_ref.shape[0]

    nll_step = None
    cnt_step = None
    for b in range(bn):                                   # static, small (<=16)
        xb = x_ref[b]                                     # [C, T]
        lab = lab_ref[b]                                  # [1, T] int32

        # --- model: 1x1 conv == [K,C] @ [C,T] on the MXU (f32, exact) -------
        logits = jnp.dot(w, xb,
                         preferred_element_type=jnp.float32,
                         precision=jax.lax.Precision.HIGHEST) + bias_col  # [K,T]
        logits_ref[b] = logits.astype(logits_ref.dtype)

        # --- loss: per-pixel cross-entropy over the class (sublane) axis ----
        m = jnp.max(logits, axis=0, keepdims=True)                       # [1,T]
        lse = m + jnp.log(jnp.sum(jnp.exp(logits - m), axis=0, keepdims=True))

        k_iota = jax.lax.broadcasted_iota(jnp.int32, logits.shape, 0)    # [K,T]
        label_logit = jnp.sum(jnp.where(k_iota == lab, logits, 0.0),
                              axis=0, keepdims=True)                     # [1,T]

        valid = (lab != _IGNORE_INDEX).astype(jnp.float32)               # [1,T]
        nll = (lse - label_logit) * valid                                # [1,T]

        nll_step = nll if nll_step is None else nll_step + nll
        cnt_step = valid if cnt_step is None else cnt_step + valid

    # Pure VALU adds into a lane-wide accumulator; no per-step reduction.
    acc_nll_ref[...] += nll_step
    acc_cnt_ref[...] += cnt_step

    @pl.when(t == n_tiles - 1)
    def _finalize():
        nll_sum = jnp.sum(acc_nll_ref[...])     # one cross-lane reduce / block
        cnt_sum = jnp.sum(acc_cnt_ref[...])
        part_ref[0, 0:1, :] = jnp.full((1, _LANE), nll_sum, jnp.float32)
        part_ref[0, 1:2, :] = jnp.full((1, _LANE), cnt_sum, jnp.float32)


def _round_up(x, m):
    return ((x + m - 1) // m) * m


def _choose_tiling(n, hw):
    """Pick (tile, n_tiles, hw_pad, bn, n_pad) for the (image, pixel) grid."""
    hw128 = _round_up(hw, _LANE)
    if hw128 <= _MAX_TILE:
        tile = hw128
    else:
        # Prefer an exact divisor of hw128 (multiple of 128, >= _MIN_TILE) so no
        # pixel padding is needed; otherwise cap the tile and pad the tail.
        tile = _MAX_TILE
        for cand in range(_MAX_TILE, _MIN_TILE - 1, -_LANE):
            if hw128 % cand == 0:
                tile = cand
                break
    n_tiles = -(-hw128 // tile)
    hw_pad = n_tiles * tile

    # Batch images per step when a single image's pixel tile is small.
    bn = max(1, min(n, _TARGET_LANES // tile, _MAX_BN))
    n_pad = _round_up(n, bn)
    return tile, n_tiles, hw_pad, bn, n_pad


def full_model_forward(inputs, labels, weight, bias):
    """JAX equivalent of FullModel.forward(inputs, labels).

    inputs : [N, C, H, W] float32   (NCHW, like PyTorch)
    labels : [N, H, W]    int32     (class indices; -100 = ignore)
    weight : [K, C]       float32   (Conv2d 1x1 weight, squeezed)
    bias   : [K]          float32

    Returns (loss of shape (1,), outputs of shape [N, K, H, W]).
    """
    N, C, H, W = inputs.shape
    K = weight.shape[0]
    HW = H * W

    tile, n_tiles, hw_pad, bn, n_pad = _choose_tiling(N, HW)
    n_blocks = n_pad // bn

    # Zero-copy NCHW views: pixels on the lane axis, no transposes anywhere.
    x = inputs.reshape(N, C, HW).astype(jnp.float32)
    lab = labels.reshape(N, 1, HW).astype(jnp.int32)
    if hw_pad != HW or n_pad != N:
        # Pad pixels with zeros and labels with ignore_index -> zero loss
        # contribution; padded logits are sliced off below.
        x = jnp.pad(x, ((0, n_pad - N), (0, 0), (0, hw_pad - HW)))
        lab = jnp.pad(lab, ((0, n_pad - N), (0, 0), (0, hw_pad - HW)),
                      constant_values=_IGNORE_INDEX)

    w = weight.astype(jnp.float32)                 # [K, C]
    b = bias.reshape(K, 1).astype(jnp.float32)     # [K, 1]

    logits, partials = pl.pallas_call(
        _full_model_kernel,
        out_shape=(
            jax.ShapeDtypeStruct((n_pad, K, hw_pad), jnp.float32),
            jax.ShapeDtypeStruct((n_blocks, 2, _LANE), jnp.float32),
        ),
        grid=(n_blocks, n_tiles),
        in_specs=[
            pl.BlockSpec((bn, C, tile), lambda nb, t: (nb, 0, t)),   # x
            pl.BlockSpec((K, C), lambda nb, t: (0, 0)),              # w (resident)
            pl.BlockSpec((K, 1), lambda nb, t: (0, 0)),              # b (resident)
            pl.BlockSpec((bn, 1, tile), lambda nb, t: (nb, 0, t)),   # labels
        ],
        out_specs=(
            pl.BlockSpec((bn, K, tile), lambda nb, t: (nb, 0, t)),   # logits
            pl.BlockSpec((1, 2, _LANE), lambda nb, t: (nb, 0, 0)),   # partials
        ),
        scratch_shapes=[
            pltpu.VMEM((1, tile), jnp.float32),   # NLL accumulator (lane-wide)
            pltpu.VMEM((1, tile), jnp.float32),   # valid-pixel accumulator
        ],
        compiler_params=pltpu.CompilerParams(
            # image-block axis is independent -> shards across v7x's two TCs;
            # pixel-tile axis carries the loss accumulation -> arbitrary.
            dimension_semantics=("parallel", "arbitrary"),
        ),
    )(x, w, b, lab)

    nll_total = jnp.sum(partials[:, 0, 0])
    cnt_total = jnp.sum(partials[:, 1, 0])
    # PyTorch CrossEntropyLoss(reduction='mean') semantics: 0/0 -> NaN when
    # every pixel is ignored.
    loss = nll_total / cnt_total

    outputs = logits[:N, :, :HW].reshape(N, K, H, W)
    return loss.reshape(1), outputs


def _reference_forward(inputs, labels, weight, bias):
    """Pure-JAX reference (all labels assumed valid here)."""
    N, C, H, W = inputs.shape
    K = weight.shape[0]
    logits = jnp.einsum("nchw,kc->nkhw", inputs, weight,
                        precision=jax.lax.Precision.HIGHEST)
    logits = logits + bias[None, :, None, None]
    lg = jnp.transpose(logits, (0, 2, 3, 1)).reshape(-1, K)
    lab = labels.reshape(-1)
    lse = jax.nn.logsumexp(lg, axis=-1)
    ll = jnp.take_along_axis(lg, lab[:, None], axis=-1)[:, 0]
    loss = jnp.mean(lse - ll)
    return loss, logits


if __name__ == "__main__":
    # Small shapes consistent with the forward pass.
    N, C, H, W, K = 2, 4, 16, 16, 8

    key = jax.random.PRNGKey(0)
    k_x, k_lab, k_w, k_b = jax.random.split(key, 4)

    inputs = jax.random.normal(k_x, (N, C, H, W), dtype=jnp.float32)
    labels = jax.random.randint(k_lab, (N, H, W), 0, K, dtype=jnp.int32)
    weight = 0.1 * jax.random.normal(k_w, (K, C), dtype=jnp.float32)
    bias = 0.01 * jax.random.normal(k_b, (K,), dtype=jnp.float32)

    loss, outputs = jax.jit(full_model_forward)(inputs, labels, weight, bias)
    jax.block_until_ready((loss, outputs))

    assert loss.shape == (1,), loss.shape
    assert outputs.shape == (N, K, H, W), outputs.shape
    assert bool(jnp.isfinite(loss[0])), "non-finite loss"

    # Numerical check against a pure-JAX reference.
    ref_loss, ref_out = _reference_forward(inputs, labels, weight, bias)
    assert bool(jnp.allclose(outputs, ref_out, rtol=1e-4, atol=1e-4)), "logits mismatch"
    assert bool(jnp.allclose(loss[0], ref_loss, rtol=1e-4, atol=1e-4)), "loss mismatch"

    print("KERNEL_OK")
</pallas_src>

<mosaic_0001>
module attributes {stable_mosaic.version = 11 : i64} {
  func.func @_full_model_kernel(%arg0: i32, %arg1: i32, %arg2: memref<2x4x256xf32, #tpu.memory_space<vmem>>, %arg3: memref<8x4xf32, #tpu.memory_space<vmem>>, %arg4: memref<8x1xf32, #tpu.memory_space<vmem>>, %arg5: memref<2x1x256xi32, #tpu.memory_space<vmem>>, %arg6: memref<2x8x256xf32, #tpu.memory_space<vmem>>, %arg7: memref<1x2x128xf32, #tpu.memory_space<vmem>>, %arg8: memref<1x256xf32, #tpu.memory_space<vmem>>, %arg9: memref<1x256xf32, #tpu.memory_space<vmem>>) attributes {dimension_semantics = [#tpu.dimension_semantics<parallel>, #tpu.dimension_semantics<arbitrary>], iteration_bounds = array<i64: 1, 1>, scalar_prefetch = 0 : i64, scratch_operands = 2 : i64, tpu.core_type = #tpu.core_type<tc>, window_params = [{transform_indices = @transform_0, window_bounds = array<i64: 2, 4, 256>}, {pipeline_mode = #tpu.pipeline_mode<synchronous>, transform_indices = @transform_1, window_bounds = array<i64: 8, 4>}, {pipeline_mode = #tpu.pipeline_mode<synchronous>, transform_indices = @transform_2, window_bounds = array<i64: 8, 1>}, {transform_indices = @transform_3, window_bounds = array<i64: 2, 1, 256>}, {transform_indices = @transform_4, window_bounds = array<i64: 2, 8, 256>}, {transform_indices = @transform_5, window_bounds = array<i64: 1, 2, 128>}]} {
    %c0_i32 = arith.constant 0 : i32
    %0 = arith.cmpi eq, %arg1, %c0_i32 : i32
    %1 = arith.extui %0 : i1 to i32
    %c0_i32_0 = arith.constant 0 : i32
    %2 = arith.cmpi ne, %1, %c0_i32_0 : i32
    scf.if %2 {
      %cst_41 = arith.constant 0.000000e+00 : f32
      %80 = vector.broadcast %cst_41 : f32 to vector<1x256xf32>
      %c0_42 = arith.constant 0 : index
      %c0_43 = arith.constant 0 : index
      %81 = vector.load %arg8[%c0_42, %c0_43] : memref<1x256xf32, #tpu.memory_space<vmem>>, vector<1x256xf32>
      tpu.vector_store %arg8[%c0_42, %c0_43], %80 {strides = array<i32>} : memref<1x256xf32, #tpu.memory_space<vmem>>, vector<1x256xf32>,
      %cst_44 = arith.constant 0.000000e+00 : f32
      %82 = vector.broadcast %cst_44 : f32 to vector<1x256xf32>
      %c0_45 = arith.constant 0 : index
      %c0_46 = arith.constant 0 : index
      %83 = vector.load %arg9[%c0_45, %c0_46] : memref<1x256xf32, #tpu.memory_space<vmem>>, vector<1x256xf32>
      tpu.vector_store %arg9[%c0_45, %c0_46], %82 {strides = array<i32>} : memref<1x256xf32, #tpu.memory_space<vmem>>, vector<1x256xf32>,
    } else {
    }
    %c0 = arith.constant 0 : index
    %c0_1 = arith.constant 0 : index
    %3 = vector.load %arg3[%c0, %c0_1] : memref<8x4xf32, #tpu.memory_space<vmem>>, vector<8x4xf32>
    %c0_2 = arith.constant 0 : index
    %c0_3 = arith.constant 0 : index
    %4 = vector.load %arg4[%c0_2, %c0_3] : memref<8x1xf32, #tpu.memory_space<vmem>>, vector<8x1xf32>
    %c0_4 = arith.constant 0 : index
    %c0_5 = arith.constant 0 : index
    %c0_6 = arith.constant 0 : index
    %5 = vector.load %arg2[%c0_4, %c0_5, %c0_6] : memref<2x4x256xf32, #tpu.memory_space<vmem>>, vector<1x4x256xf32>
    %6 = vector.shape_cast %5 : vector<1x4x256xf32> to vector<4x256xf32>
    %c0_7 = arith.constant 0 : index
    %c0_8 = arith.constant 0 : index
    %c0_9 = arith.constant 0 : index
    %7 = vector.load %arg5[%c0_7, %c0_8, %c0_9] : memref<2x1x256xi32, #tpu.memory_space<vmem>>, vector<1x1x256xi32>
    %8 = vector.shape_cast %7 : vector<1x1x256xi32> to vector<1x256xi32>
    %cst = arith.constant dense<0.000000e+00> : vector<8x256xf32>
    %9 = tpu.matmul %3, %6, %cst {dimension_numbers = #tpu.dot_dimension_numbers<[1], [0], [0], [1], [0, 0, 1, 1], [], []>, precision = #tpu.contract_precision<fp32>} : vector<8x4xf32>, vector<4x256xf32>, vector<8x256xf32> -> vector<8x256xf32>
    %10 = vector.broadcast %4 : vector<8x1xf32> to vector<8x256xf32>
    %11 = arith.addf %9, %10 : vector<8x256xf32>
    %c0_10 = arith.constant 0 : index
    %c0_11 = arith.constant 0 : index
    %c0_12 = arith.constant 0 : index
    %12 = vector.load %arg6[%c0_10, %c0_11, %c0_12] : memref<2x8x256xf32, #tpu.memory_space<vmem>>, vector<1x8x256xf32>
    %13 = vector.shape_cast %12 : vector<1x8x256xf32> to vector<8x256xf32>
    %14 = vector.shape_cast %11 : vector<8x256xf32> to vector<1x8x256xf32>
    tpu.vector_store %arg6[%c0_10, %c0_11, %c0_12], %14 {strides = array<i32>} : memref<2x8x256xf32, #tpu.memory_space<vmem>>, vector<1x8x256xf32>,
    %cst_13 = arith.constant dense<0xFF800000> : vector<256xf32>
    %15 = vector.multi_reduction <maximumf>, %11, %cst_13 [0] : vector<8x256xf32> to vector<256xf32>
    %16 = vector.shape_cast %15 : vector<256xf32> to vector<1x256xf32>
    %17 = vector.broadcast %16 : vector<1x256xf32> to vector<8x256xf32>
    %18 = arith.subf %11, %17 : vector<8x256xf32>
    %19 = math.exp %18 : vector<8x256xf32>
    %cst_14 = arith.constant dense<0.000000e+00> : vector<256xf32>
    %20 = vector.multi_reduction <add>, %19, %cst_14 [0] : vector<8x256xf32> to vector<256xf32>
    %21 = vector.shape_cast %20 : vector<256xf32> to vector<1x256xf32>
    %22 = math.log %21 : vector<1x256xf32>
    %23 = arith.addf %16, %22 : vector<1x256xf32>
    %24 = tpu.iota {dimensions = array<i32: 0>} : vector<8x256xi32>
    %25 = vector.broadcast %8 : vector<1x256xi32> to vector<8x256xi32>
    %26 = arith.cmpi eq, %24, %25 : vector<8x256xi32>
    %cst_15 = arith.constant 0.000000e+00 : f32
    %27 = vector.broadcast %cst_15 : f32 to vector<8x256xf32>
    %28 = arith.select %26, %11, %27 : vector<8x256xi1>, vector<8x256xf32>
    %cst_16 = arith.constant dense<0.000000e+00> : vector<256xf32>
    %29 = vector.multi_reduction <add>, %28, %cst_16 [0] : vector<8x256xf32> to vector<256xf32>
    %30 = vector.shape_cast %29 : vector<256xf32> to vector<1x256xf32>
    %c-100_i32 = arith.constant -100 : i32
    %31 = vector.broadcast %c-100_i32 : i32 to vector<1x256xi32>
    %32 = arith.cmpi ne, %8, %31 : vector<1x256xi32>
    %33 = arith.extui %32 : vector<1x256xi1> to vector<1x256xi32>
    %34 = arith.sitofp %33 : vector<1x256xi32> to vector<1x256xf32>
    %35 = arith.subf %23, %30 : vector<1x256xf32>
    %36 = arith.mulf %35, %34 : vector<1x256xf32>
    %c1 = arith.constant 1 : index
    %c0_17 = arith.constant 0 : index
    %c0_18 = arith.constant 0 : index
    %37 = vector.load %arg2[%c1, %c0_17, %c0_18] : memref<2x4x256xf32, #tpu.memory_space<vmem>>, vector<1x4x256xf32>
    %38 = vector.shape_cast %37 : vector<1x4x256xf32> to vector<4x256xf32>
    %c1_19 = arith.constant 1 : index
    %c0_20 = arith.constant 0 : index
    %c0_21 = arith.constant 0 : index
    %39 = vector.load %arg5[%c1_19, %c0_20, %c0_21] : memref<2x1x256xi32, #tpu.memory_space<vmem>>, vector<1x1x256xi32>
    %40 = vector.shape_cast %39 : vector<1x1x256xi32> to vector<1x256xi32>
    %cst_22 = arith.constant dense<0.000000e+00> : vector<8x256xf32>
    %41 = tpu.matmul %3, %38, %cst_22 {dimension_numbers = #tpu.dot_dimension_numbers<[1], [0], [0], [1], [0, 0, 1, 1], [], []>, precision = #tpu.contract_precision<fp32>} : vector<8x4xf32>, vector<4x256xf32>, vector<8x256xf32> -> vector<8x256xf32>
    %42 = vector.broadcast %4 : vector<8x1xf32> to vector<8x256xf32>
    %43 = arith.addf %41, %42 : vector<8x256xf32>
    %c1_23 = arith.constant 1 : index
    %c0_24 = arith.constant 0 : index
    %c0_25 = arith.constant 0 : index
    %44 = vector.load %arg6[%c1_23, %c0_24, %c0_25] : memref<2x8x256xf32, #tpu.memory_space<vmem>>, vector<1x8x256xf32>
    %45 = vector.shape_cast %44 : vector<1x8x256xf32> to vector<8x256xf32>
    %46 = vector.shape_cast %43 : vector<8x256xf32> to vector<1x8x256xf32>
    tpu.vector_store %arg6[%c1_23, %c0_24, %c0_25], %46 {strides = array<i32>} : memref<2x8x256xf32, #tpu.memory_space<vmem>>, vector<1x8x256xf32>,
    %cst_26 = arith.constant dense<0xFF800000> : vector<256xf32>
    %47 = vector.multi_reduction <maximumf>, %43, %cst_26 [0] : vector<8x256xf32> to vector<256xf32>
    %48 = vector.shape_cast %47 : vector<256xf32> to vector<1x256xf32>
    %49 = vector.broadcast %48 : vector<1x256xf32> to vector<8x256xf32>
    %50 = arith.subf %43, %49 : vector<8x256xf32>
    %51 = math.exp %50 : vector<8x256xf32>
    %cst_27 = arith.constant dense<0.000000e+00> : vector<256xf32>
    %52 = vector.multi_reduction <add>, %51, %cst_27 [0] : vector<8x256xf32> to vector<256xf32>
    %53 = vector.shape_cast %52 : vector<256xf32> to vector<1x256xf32>
    %54 = math.log %53 : vector<1x256xf32>
    %55 = arith.addf %48, %54 : vector<1x256xf32>
    %56 = tpu.iota {dimensions = array<i32: 0>} : vector<8x256xi32>
    %57 = vector.broadcast %40 : vector<1x256xi32> to vector<8x256xi32>
    %58 = arith.cmpi eq, %56, %57 : vector<8x256xi32>
    %cst_28 = arith.constant 0.000000e+00 : f32
    %59 = vector.broadcast %cst_28 : f32 to vector<8x256xf32>
    %60 = arith.select %58, %43, %59 : vector<8x256xi1>, vector<8x256xf32>
    %cst_29 = arith.constant dense<0.000000e+00> : vector<256xf32>
    %61 = vector.multi_reduction <add>, %60, %cst_29 [0] : vector<8x256xf32> to vector<256xf32>
    %62 = vector.shape_cast %61 : vector<256xf32> to vector<1x256xf32>
    %c-100_i32_30 = arith.constant -100 : i32
    %63 = vector.broadcast %c-100_i32_30 : i32 to vector<1x256xi32>
    %64 = arith.cmpi ne, %40, %63 : vector<1x256xi32>
    %65 = arith.extui %64 : vector<1x256xi1> to vector<1x256xi32>
    %66 = arith.sitofp %65 : vector<1x256xi32> to vector<1x256xf32>
    %67 = arith.subf %55, %62 : vector<1x256xf32>
    %68 = arith.mulf %67, %66 : vector<1x256xf32>
    %69 = arith.addf %36, %68 : vector<1x256xf32>
    %70 = arith.addf %34, %66 : vector<1x256xf32>
    %c0_31 = arith.constant 0 : index
    %c0_32 = arith.constant 0 : index
    %71 = vector.load %arg8[%c0_31, %c0_32] : memref<1x256xf32, #tpu.memory_space<vmem>>, vector<1x256xf32>
    %72 = arith.addf %71, %69 : vector<1x256xf32>
    %c0_33 = arith.constant 0 : index
    %c0_34 = arith.constant 0 : index
    %73 = vector.load %arg8[%c0_33, %c0_34] : memref<1x256xf32, #tpu.memory_space<vmem>>, vector<1x256xf32>
    tpu.vector_store %arg8[%c0_33, %c0_34], %72 {strides = array<i32>} : memref<1x256xf32, #tpu.memory_space<vmem>>, vector<1x256xf32>,
    %c0_35 = arith.constant 0 : index
    %c0_36 = arith.constant 0 : index
    %74 = vector.load %arg9[%c0_35, %c0_36] : memref<1x256xf32, #tpu.memory_space<vmem>>, vector<1x256xf32>
    %75 = arith.addf %74, %70 : vector<1x256xf32>
    %c0_37 = arith.constant 0 : index
    %c0_38 = arith.constant 0 : index
    %76 = vector.load %arg9[%c0_37, %c0_38] : memref<1x256xf32, #tpu.memory_space<vmem>>, vector<1x256xf32>
    tpu.vector_store %arg9[%c0_37, %c0_38], %75 {strides = array<i32>} : memref<1x256xf32, #tpu.memory_space<vmem>>, vector<1x256xf32>,
    %c0_i32_39 = arith.constant 0 : i32
    %77 = arith.cmpi eq, %arg1, %c0_i32_39 : i32
    %78 = arith.extui %77 : i1 to i32
    %c0_i32_40 = arith.constant 0 : i32
    %79 = arith.cmpi ne, %78, %c0_i32_40 : i32
    scf.if %79 {
      %c0_41 = arith.constant 0 : index
      %c0_42 = arith.constant 0 : index
      %80 = vector.load %arg8[%c0_41, %c0_42] : memref<1x256xf32, #tpu.memory_space<vmem>>, vector<1x256xf32>
      %81 = vector.shape_cast %80 : vector<1x256xf32> to vector<1x1x256xf32>
      %cst_43 = arith.constant dense<0.000000e+00> : vector<1xf32>
      %82 = vector.multi_reduction <add>, %81, %cst_43 [1, 2] : vector<1x1x256xf32> to vector<1xf32>
      %83 = vector.shape_cast %82 : vector<1xf32> to vector<1x1x1xf32>
      %84 = vector.extract %83[0, 0, 0] : f32 from vector<1x1x1xf32>
      %c0_44 = arith.constant 0 : index
      %c0_45 = arith.constant 0 : index
      %85 = vector.load %arg9[%c0_44, %c0_45] : memref<1x256xf32, #tpu.memory_space<vmem>>, vector<1x256xf32>
      %86 = vector.shape_cast %85 : vector<1x256xf32> to vector<1x1x256xf32>
      %cst_46 = arith.constant dense<0.000000e+00> : vector<1xf32>
      %87 = vector.multi_reduction <add>, %86, %cst_46 [1, 2] : vector<1x1x256xf32> to vector<1xf32>
      %88 = vector.shape_cast %87 : vector<1xf32> to vector<1x1x1xf32>
      %89 = vector.extract %88[0, 0, 0] : f32 from vector<1x1x1xf32>
      %90 = vector.broadcast %84 : f32 to vector<1x128xf32>
      %c0_47 = arith.constant 0 : index
      %c0_48 = arith.constant 0 : index
      %c0_49 = arith.constant 0 : index
      %91 = vector.load %arg7[%c0_47, %c0_48, %c0_49] : memref<1x2x128xf32, #tpu.memory_space<vmem>>, vector<1x1x128xf32>
      %92 = vector.shape_cast %91 : vector<1x1x128xf32> to vector<1x128xf32>
      %93 = vector.shape_cast %90 : vector<1x128xf32> to vector<1x1x128xf32>
      tpu.vector_store %arg7[%c0_47, %c0_48, %c0_49], %93 {strides = array<i32>} : memref<1x2x128xf32, #tpu.memory_space<vmem>>, vector<1x1x128xf32>,
      %94 = vector.broadcast %89 : f32 to vector<1x128xf32>
      %c0_50 = arith.constant 0 : index
      %c1_51 = arith.constant 1 : index
      %c0_52 = arith.constant 0 : index
      %95 = vector.load %arg7[%c0_50, %c1_51, %c0_52] : memref<1x2x128xf32, #tpu.memory_space<vmem>>, vector<1x1x128xf32>
      %96 = vector.shape_cast %95 : vector<1x1x128xf32> to vector<1x128xf32>
      %97 = vector.shape_cast %94 : vector<1x128xf32> to vector<1x1x128xf32>
      tpu.vector_store %arg7[%c0_50, %c1_51, %c0_52], %97 {strides = array<i32>} : memref<1x2x128xf32, #tpu.memory_space<vmem>>, vector<1x1x128xf32>,
    } else {
    }
    return
  }
  func.func @transform_0(%arg0: i32, %arg1: i32) -> (i32, i32, i32) {
    %c0_i32 = arith.constant 0 : i32
    %c0_i32_0 = arith.constant 0 : i32
    return %arg0, %c0_i32, %arg1 : i32, i32, i32
  }
  func.func @transform_1(%arg0: i32, %arg1: i32) -> (i32, i32) {
    %c0_i32 = arith.constant 0 : i32
    %c0_i32_0 = arith.constant 0 : i32
    %c0_i32_1 = arith.constant 0 : i32
    return %c0_i32, %c0_i32_0 : i32, i32
  }
  func.func @transform_2(%arg0: i32, %arg1: i32) -> (i32, i32) {
    %c0_i32 = arith.constant 0 : i32
    %c0_i32_0 = arith.constant 0 : i32
    %c0_i32_1 = arith.constant 0 : i32
    return %c0_i32, %c0_i32_0 : i32, i32
  }
  func.func @transform_3(%arg0: i32, %arg1: i32) -> (i32, i32, i32) {
    %c0_i32 = arith.constant 0 : i32
    %c0_i32_0 = arith.constant 0 : i32
    return %arg0, %c0_i32, %arg1 : i32, i32, i32
  }
  func.func @transform_4(%arg0: i32, %arg1: i32) -> (i32, i32, i32) {
    %c0_i32 = arith.constant 0 : i32
    %c0_i32_0 = arith.constant 0 : i32
    return %arg0, %c0_i32, %arg1 : i32, i32, i32
  }
  func.func @transform_5(%arg0: i32, %arg1: i32) -> (i32, i32, i32) {
    %c0_i32 = arith.constant 0 : i32
    %c0_i32_0 = arith.constant 0 : i32
    %c0_i32_1 = arith.constant 0 : i32
    return %arg0, %c0_i32, %c0_i32_0 : i32, i32, i32
  }
}

</mosaic_0001>

<llo_original>
// kernel: full_model_forward.1
$region0: #{full_model_forward.1}
  #allocation0 [shape = 'u32[]', space=smem, size = 0x4, offset = 0x4, fixed_abs, tag = 'smem constant byte address 0x4 - core index']
  #allocation1 [shape = 'u32[144,128]{1,0:T(1,128)}', space=vmem, size = 0x12000, scoped, tag = 'internal scratch']
  #allocation2 [shape = 'f32[1,256]{1,0:T(1,128)}', space=vmem, size = 0x400, scoped, tag = 'scratch operand']
  #allocation3 [shape = 'f32[1,256]{1,0:T(1,128)}', space=vmem, size = 0x400, scoped, tag = 'scratch operand']
  %s0 = inlined_call_operand.vmem [shape: f32[2,4,256], index: 0, kind: input, shape index: {}]
  %s1 = inlined_call_operand.vmem [shape: f32[8,4], index: 1, kind: input, shape index: {}]
  %s2 = inlined_call_operand.vmem [shape: f32[8,1], index: 2, kind: input, shape index: {}]
  %s3 = inlined_call_operand.vmem [shape: s32[2,1,256], index: 3, kind: input, shape index: {}]
  %s4 = inlined_call_operand.vmem [shape: f32[2,8,256], index: 4, kind: output, shape index: {0}]
  %s5 = inlined_call_operand.vmem [shape: f32[1,2,128], index: 5, kind: output, shape index: {1}]
  %6 = xla_tuple %s4, %s5
  %s7 = sld [smem:[#allocation0]]
  $region42: #{full_model_forward.1} parent=0
    _
  %s9 = ssub.s32 1, %s7
  %s10 = scalar_select 0, %s9, %s7
  // Predicated region
  $region2: #{full_model_forward.1} parent=0 // pred_check
    _
  $region3: #{full_model_forward.1} parent=0 // pred_check_branch
    %12 = sbr.rel (0) target = $region5
  $region4: #{full_model_forward.1} parent=0 // pred_region
    _
  $region5: #{full_model_forward.1} parent=0 // pred_fallthru
    _
  // Predicated region
  $region6: #{full_model_forward.1} parent=0 // pred_check
    _
  $region7: #{full_model_forward.1} parent=0 // pred_check_branch
    %14 = sbr.rel (0) target = $region9
  $region8: #{full_model_forward.1} parent=0 // pred_region
    _
  $region9: #{full_model_forward.1} parent=0 // pred_fallthru
    _
  // Predicated region
  $region10: #{full_model_forward.1} parent=0 // pred_check
    _
  $region11: #{full_model_forward.1} parent=0 // pred_check_branch
    %16 = sbr.rel (0) target = $region13
  $region12: #{full_model_forward.1} parent=0 // pred_region
    _
  $region13: #{full_model_forward.1} parent=0 // pred_fallthru
    _
  // Predicated region
  $region14: #{full_model_forward.1} parent=0 // pred_check
    _
  $region15: #{full_model_forward.1} parent=0 // pred_check_branch
    %18 = sbr.rel (0) target = $region17
  $region16: #{full_model_forward.1} parent=0 // pred_region
    _
  $region17: #{full_model_forward.1} parent=0 // pred_fallthru
    _
  %p19 = scmp.eq.s32.totalorder 0, 0
  // Predicated region
  $region18: #{full_model_forward.1} parent=0 // pred_check
    %p20 = pneg %p19
  $region19: #{full_model_forward.1} parent=0 // pred_check_branch
    %22 = sbr.rel (%p20) target = $region21
  $region20: #{full_model_forward.1} parent=0 // pred_region
    %v23 = vlaneseq
    %vm24 = vcmp.ge.s32.totalorder %v23, 0
    %vm25 = vcmp.lt.s32.totalorder %v23, 256
    %vm26 = vmand %vm24, %vm25
    %27 = vst.msk [vmem:[#allocation2] sm:$0x3] %vm26, 0.0
    %28 = vst.msk [vmem:[#allocation3] sm:$0x3] %vm26, 0.0
  $region21: #{full_model_forward.1} parent=0 // pred_fallthru
    _
  %v29 = vld [vmem:[%s1] sm:$0xff]
  %v30 = vld [vmem:[%s2] sm:$0xff]
  %v31 = vld [vmem:[%s0] sm:$0xff]
  %v32 = vld [vmem:[%s3] sm:$0x3]
  %34 = vset.pattern.permute.xlu0 0
  %35 = vperm.xlu0 %34, %v30
  %v36 = vpop.permute.xlu0 %35
  %v39 = vcombine.high %v31, %v31
  %vm40 = vcmask 31744
  %v42 = vsel %vm40, %v29, 0
  %vm44 = vcmask 1043456
  %v45 = vsel %vm44, %v31, 0
  %v47 = vsel %vm44, %v39, 0
  %v49 = vand.u32 %v47, 4294901760
  %50 = vmatprep.subr.mxu0 %v49
  %v51 = vand.u32 %v45, 4294901760
  %52 = vmatpush1.msra.mxu0 %v51
  %53 = vmatprep.subr.mxu0 0.0
  %54 = vmatpush1.msra.mxu0 0.0
  %55 = vmatprep.subr.mxu0 0.0
  %56 = vmatpush1.msra.mxu0 0.0
  %57 = vmatprep.subr.mxu0 0.0
  %58 = vmatpush1.msra.mxu0 0.0
  %59 = vmatprep.subr.mxu0 0.0
  %60 = vmatpush1.msra.mxu0 0.0
  %61 = vmatprep.subr.mxu0 0.0
  %62 = vmatpush1.msra.mxu0 0.0
  %63 = vmatprep.subr.mxu0 0.0
  %64 = vmatpush1.msra.mxu0 0.0
  %65 = vmatprep.subr.mxu0 0.0
  %66 = vmatpush1.msra.mxu0 0.0
  %67 = vmatprep.subr.mxu0 0.0
  %68 = vmatpush1.msra.mxu0 0.0
  %69 = vmatprep.subr.mxu0 0.0
  %70 = vmatpush1.msra.mxu0 0.0
  %71 = vmatprep.subr.mxu0 0.0
  %72 = vmatpush1.msra.mxu0 0.0
  %73 = vmatprep.subr.mxu0 0.0
  %74 = vmatpush1.msra.mxu0 0.0
  %75 = vmatprep.subr.mxu0 0.0
  %76 = vmatpush1.msra.mxu0 0.0
  %77 = vmatprep.subr.mxu0 0.0
  %78 = vmatpush1.msra.mxu0 0.0
  %79 = vmatprep.subr.mxu0 0.0
  %80 = vmatpush1.msra.mxu0 0.0
  %81 = vmatprep.subr.mxu0 0.0
  %82 = vmatpush1.msra.mxu0 0.0
  %83 = vmatprep.subr.mxu0 0.0
  %84 = vmatpush1.msra.mxu0 0.0
  %85 = vmatprep.subr.mxu0 0.0
  %86 = vmatpush1.msra.mxu0 0.0
  %87 = vmatprep.subr.mxu0 0.0
  %88 = vmatpush1.msra.mxu0 0.0
  %89 = vmatprep.subr.mxu0 0.0
  %90 = vmatpush1.msra.mxu0 0.0
  %91 = vmatprep.subr.mxu0 0.0
  %92 = vmatpush1.msra.mxu0 0.0
  %93 = vmatprep.subr.mxu0 0.0
  %94 = vmatpush1.msra.mxu0 0.0
  %95 = vmatprep.subr.mxu0 0.0
  %96 = vmatpush1.msra.mxu0 0.0
  %97 = vmatprep.subr.mxu0 0.0
  %98 = vmatpush1.msra.mxu0 0.0
  %99 = vmatprep.subr.mxu0 0.0
  %100 = vmatpush1.msra.mxu0 0.0
  %101 = vmatprep.subr.mxu0 0.0
  %102 = vmatpush1.msra.mxu0 0.0
  %103 = vmatprep.subr.mxu0 0.0
  %104 = vmatpush1.msra.mxu0 0.0
  %105 = vmatprep.subr.mxu0 0.0
  %106 = vmatpush1.msra.mxu0 0.0
  %107 = vmatprep.subr.mxu0 0.0
  %108 = vmatpush1.msra.mxu0 0.0
  %109 = vmatprep.subr.mxu0 0.0
  %110 = vmatpush1.msra.mxu0 0.0
  %111 = vmatprep.subr.mxu0 0.0
  %112 = vmatpush1.msra.mxu0 0.0
  %113 = vmatprep.subr.mxu0 0.0
  %114 = vmatpush1.msra.mxu0 0.0
  %115 = vmatprep.mubr.f32.mxu0 0.0
  %v116 = vand.u32 %v42, 4294901760
  %v117 = vsub.f32 %v42, %v116
  %v118 = vand.u32 %v117, 4294901760
  %v119 = vsub.f32 %v117, %v118
  %v120 = vand.u32 %v119, 4294901760
  %121 = vmatmul.mubr.f32.gmra.mrb[0].mxu0 %v120
  %v122 = vpop.f32.mrb[0].mxu0
  %v123 = vadd.f32 %v36, %v122
  %v124 = vpop.f32.mrb[0].mxu0
  %v125 = vadd.f32 %v36, %v124
  %126 = vdwg.mxu0
  %v127 = vand.u32 %v47, 4294901760
  %v128 = vsub.f32 %v47, %v127
  %v129 = vand.u32 %v128, 4294901760
  %v130 = vsub.f32 %v128, %v129
  %v131 = vand.u32 %v130, 4294901760
  %132 = vmatprep.subr.mxu0 %v131
  %v133 = vand.u32 %v45, 4294901760
  %v134 = vsub.f32 %v45, %v133
  %v135 = vand.u32 %v134, 4294901760
  %v136 = vsub.f32 %v134, %v135
  %v137 = vand.u32 %v136, 4294901760
  %138 = vmatpush1.msra.mxu0 %v137
  %139 = vmatprep.subr.mxu0 0.0
  %140 = vmatpush1.msra.mxu0 0.0
  %141 = vmatprep.subr.mxu0 0.0
  %142 = vmatpush1.msra.mxu0 0.0
  %143 = vmatprep.subr.mxu0 0.0
  %144 = vmatpush1.msra.mxu0 0.0
  %145 = vmatprep.subr.mxu0 0.0
  %146 = vmatpush1.msra.mxu0 0.0
  %147 = vmatprep.subr.mxu0 0.0
  %148 = vmatpush1.msra.mxu0 0.0
  %149 = vmatprep.subr.mxu0 0.0
  %150 = vmatpush1.msra.mxu0 0.0
  %151 = vmatprep.subr.mxu0 0.0
  %152 = vmatpush1.msra.mxu0 0.0
  %153 = vmatprep.subr.mxu0 0.0
  %154 = vmatpush1.msra.mxu0 0.0
  %155 = vmatprep.subr.mxu0 0.0
  %156 = vmatpush1.msra.mxu0 0.0
  %157 = vmatprep.subr.mxu0 0.0
  %158 = vmatpush1.msra.mxu0 0.0
  %159 = vmatprep.subr.mxu0 0.0
  %160 = vmatpush1.msra.mxu0 0.0
  %161 = vmatprep.subr.mxu0 0.0
  %162 = vmatpush1.msra.mxu0 0.0
  %163 = vmatprep.subr.mxu0 0.0
  %164 = vmatpush1.msra.mxu0 0.0
  %165 = vmatprep.subr.mxu0 0.0
  %166 = vmatpush1.msra.mxu0 0.0
  %167 = vmatprep.subr.mxu0 0.0
  %168 = vmatpush1.msra.mxu0 0.0
  %169 = vmatprep.subr.mxu0 0.0
  %170 = vmatpush1.msra.mxu0 0.0
  %171 = vmatprep.subr.mxu0 0.0
  %172 = vmatpush1.msra.mxu0 0.0
  %173 = vmatprep.subr.mxu0 0.0
  %174 = vmatpush1.msra.mxu0 0.0
  %175 = vmatprep.subr.mxu0 0.0
  %176 = vmatpush1.msra.mxu0 0.0
  %177 = vmatprep.subr.mxu0 0.0
  %178 = vmatpush1.msra.mxu0 0.0
  %179 = vmatprep.subr.mxu0 0.0
  %180 = vmatpush1.msra.mxu0 0.0
  %181 = vmatprep.subr.mxu0 0.0
  %182 = vmatpush1.msra.mxu0 0.0
  %183 = vmatprep.subr.mxu0 0.0
  %184 = vmatpush1.msra.mxu0 0.0
  %185 = vmatprep.subr.mxu0 0.0
  %186 = vmatpush1.msra.mxu0 0.0
  %187 = vmatprep.subr.mxu0 0.0
  %188 = vmatpush1.msra.mxu0 0.0
  %189 = vmatprep.subr.mxu0 0.0
  %190 = vmatpush1.msra.mxu0 0.0
  %191 = vmatprep.subr.mxu0 0.0
  %192 = vmatpush1.msra.mxu0 0.0
  %193 = vmatprep.subr.mxu0 0.0
  %194 = vmatpush1.msra.mxu0 0.0
  %195 = vmatprep.subr.mxu0 0.0
  %196 = vmatpush1.msra.mxu0 0.0
  %197 = vmatprep.subr.mxu0 0.0
  %198 = vmatpush1.msra.mxu0 0.0
  %199 = vmatprep.subr.mxu0 0.0
  %200 = vmatpush1.msra.mxu0 0.0
  %201 = vmatprep.mubr.f32.mxu0 0.0
  %v202 = vand.u32 %v42, 4294901760
  %203 = vmatmul.mubr.f32.gmra.mrb[0].mxu0 %v202
  %v204 = vpop.f32.mrb[0].mxu0
  %v205 = vadd.f32 %v123, %v204
  %v206 = vpop.f32.mrb[0].mxu0
  %v207 = vadd.f32 %v125, %v206
  %208 = vdwg.mxu0
  %v209 = vand.u32 %v47, 4294901760
  %v210 = vsub.f32 %v47, %v209
  %211 = vmatprep.subr.mxu0 %v210
  %v212 = vand.u32 %v45, 4294901760
  %v213 = vsub.f32 %v45, %v212
  %214 = vmatpush1.msra.mxu0 %v213
  %215 = vmatprep.subr.mxu0 0.0
  %216 = vmatpush1.msra.mxu0 0.0
  %217 = vmatprep.subr.mxu0 0.0
  %218 = vmatpush1.msra.mxu0 0.0
  %219 = vmatprep.subr.mxu0 0.0
  %220 = vmatpush1.msra.mxu0 0.0
  %221 = vmatprep.subr.mxu0 0.0
  %222 = vmatpush1.msra.mxu0 0.0
  %223 = vmatprep.subr.mxu0 0.0
  %224 = vmatpush1.msra.mxu0 0.0
  %225 = vmatprep.subr.mxu0 0.0
  %226 = vmatpush1.msra.mxu0 0.0
  %227 = vmatprep.subr.mxu0 0.0
  %228 = vmatpush1.msra.mxu0 0.0
  %229 = vmatprep.subr.mxu0 0.0
  %230 = vmatpush1.msra.mxu0 0.0
  %231 = vmatprep.subr.mxu0 0.0
  %232 = vmatpush1.msra.mxu0 0.0
  %233 = vmatprep.subr.mxu0 0.0
  %234 = vmatpush1.msra.mxu0 0.0
  %235 = vmatprep.subr.mxu0 0.0
  %236 = vmatpush1.msra.mxu0 0.0
  %237 = vmatprep.subr.mxu0 0.0
  %238 = vmatpush1.msra.mxu0 0.0
  %239 = vmatprep.subr.mxu0 0.0
  %240 = vmatpush1.msra.mxu0 0.0
  %241 = vmatprep.subr.mxu0 0.0
  %242 = vmatpush1.msra.mxu0 0.0
  %243 = vmatprep.subr.mxu0 0.0
  %244 = vmatpush1.msra.mxu0 0.0
  %245 = vmatprep.subr.mxu0 0.0
  %246 = vmatpush1.msra.mxu0 0.0
  %247 = vmatprep.subr.mxu0 0.0
  %248 = vmatpush1.msra.mxu0 0.0
  %249 = vmatprep.subr.mxu0 0.0
  %250 = vmatpush1.msra.mxu0 0.0
  %251 = vmatprep.subr.mxu0 0.0
  %252 = vmatpush1.msra.mxu0 0.0
  %253 = vmatprep.subr.mxu0 0.0
  %254 = vmatpush1.msra.mxu0 0.0
  %255 = vmatprep.subr.mxu0 0.0
  %256 = vmatpush1.msra.mxu0 0.0
  %257 = vmatprep.subr.mxu0 0.0
  %258 = vmatpush1.msra.mxu0 0.0
  %259 = vmatprep.subr.mxu0 0.0
  %260 = vmatpush1.msra.mxu0 0.0
  %261 = vmatprep.subr.mxu0 0.0
  %262 = vmatpush1.msra.mxu0 0.0
  %263 = vmatprep.subr.mxu0 0.0
  %264 = vmatpush1.msra.mxu0 0.0
  %265 = vmatprep.subr.mxu0 0.0
  %266 = vmatpush1.msra.mxu0 0.0
  %267 = vmatprep.subr.mxu0 0.0
  %268 = vmatpush1.msra.mxu0 0.0
  %269 = vmatprep.subr.mxu0 0.0
  %270 = vmatpush1.msra.mxu0 0.0
  %271 = vmatprep.subr.mxu0 0.0
  %272 = vmatpush1.msra.mxu0 0.0
  %273 = vmatprep.subr.mxu0 0.0
  %274 = vmatpush1.msra.mxu0 0.0
  %275 = vmatprep.subr.mxu0 0.0
  %276 = vmatpush1.msra.mxu0 0.0
  %277 = vmatprep.mubr.f32.mxu0 0.0
  %v278 = vand.u32 %v42, 4294901760
  %v279 = vsub.f32 %v42, %v278
  %280 = vmatmul.mubr.f32.gmra.mrb[0].mxu0 %v279
  %v281 = vpop.f32.mrb[0].mxu0
  %v282 = vadd.f32 %v205, %v281
  %v283 = vpop.f32.mrb[0].mxu0
  %v284 = vadd.f32 %v207, %v283
  %285 = vdwg.mxu0
  %v286 = vand.u32 %v47, 4294901760
  %287 = vmatprep.subr.mxu0 %v286
  %v288 = vand.u32 %v45, 4294901760
  %289 = vmatpush1.msra.mxu0 %v288
  %290 = vmatprep.subr.mxu0 0.0
  %291 = vmatpush1.msra.mxu0 0.0
  %292 = vmatprep.subr.mxu0 0.0
  %293 = vmatpush1.msra.mxu0 0.0
  %294 = vmatprep.subr.mxu0 0.0
  %295 = vmatpush1.msra.mxu0 0.0
  %296 = vmatprep.subr.mxu0 0.0
  %297 = vmatpush1.msra.mxu0 0.0
  %298 = vmatprep.subr.mxu0 0.0
  %299 = vmatpush1.msra.mxu0 0.0
  %300 = vmatprep.subr.mxu0 0.0
  %301 = vmatpush1.msra.mxu0 0.0
  %302 = vmatprep.subr.mxu0 0.0
  %303 = vmatpush1.msra.mxu0 0.0
  %304 = vmatprep.subr.mxu0 0.0
  %305 = vmatpush1.msra.mxu0 0.0
  %306 = vmatprep.subr.mxu0 0.0
  %307 = vmatpush1.msra.mxu0 0.0
  %308 = vmatprep.subr.mxu0 0.0
  %309 = vmatpush1.msra.mxu0 0.0
  %310 = vmatprep.subr.mxu0 0.0
  %311 = vmatpush1.msra.mxu0 0.0
  %312 = vmatprep.subr.mxu0 0.0
  %313 = vmatpush1.msra.mxu0 0.0
  %314 = vmatprep.subr.mxu0 0.0
  %315 = vmatpush1.msra.mxu0 0.0
  %316 = vmatprep.subr.mxu0 0.0
  %317 = vmatpush1.msra.mxu0 0.0
  %318 = vmatprep.subr.mxu0 0.0
  %319 = vmatpush1.msra.mxu0 0.0
  %320 = vmatprep.subr.mxu0 0.0
  %321 = vmatpush1.msra.mxu0 0.0
  %322 = vmatprep.subr.mxu0 0.0
  %323 = vmatpush1.msra.mxu0 0.0
  %324 = vmatprep.subr.mxu0 0.0
  %325 = vmatpush1.msra.mxu0 0.0
  %326 = vmatprep.subr.mxu0 0.0
  %327 = vmatpush1.msra.mxu0 0.0
  %328 = vmatprep.subr.mxu0 0.0
  %329 = vmatpush1.msra.mxu0 0.0
  %330 = vmatprep.subr.mxu0 0.0
  %331 = vmatpush1.msra.mxu0 0.0
  %332 = vmatprep.subr.mxu0 0.0
  %333 = vmatpush1.msra.mxu0 0.0
  %334 = vmatprep.subr.mxu0 0.0
  %335 = vmatpush1.msra.mxu0 0.0
  %336 = vmatprep.subr.mxu0 0.0
  %337 = vmatpush1.msra.mxu0 0.0
  %338 = vmatprep.subr.mxu0 0.0
  %339 = vmatpush1.msra.mxu0 0.0
  %340 = vmatprep.subr.mxu0 0.0
  %341 = vmatpush1.msra.mxu0 0.0
  %342 = vmatprep.subr.mxu0 0.0
  %343 = vmatpush1.msra.mxu0 0.0
  %344 = vmatprep.subr.mxu0 0.0
  %345 = vmatpush1.msra.mxu0 0.0
  %346 = vmatprep.subr.mxu0 0.0
  %347 = vmatpush1.msra.mxu0 0.0
  %348 = vmatprep.subr.mxu0 0.0
  %349 = vmatpush1.msra.mxu0 0.0
  %350 = vmatprep.subr.mxu0 0.0
  %351 = vmatpush1.msra.mxu0 0.0
  %352 = vmatprep.mubr.f32.mxu0 0.0
  %v353 = vand.u32 %v42, 4294901760
  %v354 = vsub.f32 %v42, %v353
  %v355 = vand.u32 %v354, 4294901760
  %356 = vmatmul.mubr.f32.gmra.mrb[0].mxu0 %v355
  %v357 = vpop.f32.mrb[0].mxu0
  %v358 = vadd.f32 %v282, %v357
  %v359 = vpop.f32.mrb[0].mxu0
  %v360 = vadd.f32 %v284, %v359
  %361 = vdwg.mxu0
  %v362 = vand.u32 %v47, 4294901760
  %v363 = vsub.f32 %v47, %v362
  %v364 = vand.u32 %v363, 4294901760
  %365 = vmatprep.subr.mxu0 %v364
  %v366 = vand.u32 %v45, 4294901760
  %v367 = vsub.f32 %v45, %v366
  %v368 = vand.u32 %v367, 4294901760
  %369 = vmatpush1.msra.mxu0 %v368
  %370 = vmatprep.subr.mxu0 0.0
  %371 = vmatpush1.msra.mxu0 0.0
  %372 = vmatprep.subr.mxu0 0.0
  %373 = vmatpush1.msra.mxu0 0.0
  %374 = vmatprep.subr.mxu0 0.0
  %375 = vmatpush1.msra.mxu0 0.0
  %376 = vmatprep.subr.mxu0 0.0
  %377 = vmatpush1.msra.mxu0 0.0
  %378 = vmatprep.subr.mxu0 0.0
  %379 = vmatpush1.msra.mxu0 0.0
  %380 = vmatprep.subr.mxu0 0.0
  %381 = vmatpush1.msra.mxu0 0.0
  %382 = vmatprep.subr.mxu0 0.0
  %383 = vmatpush1.msra.mxu0 0.0
  %384 = vmatprep.subr.mxu0 0.0
  %385 = vmatpush1.msra.mxu0 0.0
  %386 = vmatprep.subr.mxu0 0.0
  %387 = vmatpush1.msra.mxu0 0.0
  %388 = vmatprep.subr.mxu0 0.0
  %389 = vmatpush1.msra.mxu0 0.0
  %390 = vmatprep.subr.mxu0 0.0
  %391 = vmatpush1.msra.mxu0 0.0
  %392 = vmatprep.subr.mxu0 0.0
  %393 = vmatpush1.msra.mxu0 0.0
  %394 = vmatprep.subr.mxu0 0.0
  %395 = vmatpush1.msra.mxu0 0.0
  %396 = vmatprep.subr.mxu0 0.0
  %397 = vmatpush1.msra.mxu0 0.0
  %398 = vmatprep.subr.mxu0 0.0
  %399 = vmatpush1.msra.mxu0 0.0
  %400 = vmatprep.subr.mxu0 0.0
  %401 = vmatpush1.msra.mxu0 0.0
  %402 = vmatprep.subr.mxu0 0.0
  %403 = vmatpush1.msra.mxu0 0.0
  %404 = vmatprep.subr.mxu0 0.0
  %405 = vmatpush1.msra.mxu0 0.0
  %406 = vmatprep.subr.mxu0 0.0
  %407 = vmatpush1.msra.mxu0 0.0
  %408 = vmatprep.subr.mxu0 0.0
  %409 = vmatpush1.msra.mxu0 0.0
  %410 = vmatprep.subr.mxu0 0.0
  %411 = vmatpush1.msra.mxu0 0.0
  %412 = vmatprep.subr.mxu0 0.0
  %413 = vmatpush1.msra.mxu0 0.0
  %414 = vmatprep.subr.mxu0 0.0
  %415 = vmatpush1.msra.mxu0 0.0
  %416 = vmatprep.subr.mxu0 0.0
  %417 = vmatpush1.msra.mxu0 0.0
  %418 = vmatprep.subr.mxu0 0.0
  %419 = vmatpush1.msra.mxu0 0.0
  %420 = vmatprep.subr.mxu0 0.0
  %421 = vmatpush1.msra.mxu0 0.0
  %422 = vmatprep.subr.mxu0 0.0
  %423 = vmatpush1.msra.mxu0 0.0
  %424 = vmatprep.subr.mxu0 0.0
  %425 = vmatpush1.msra.mxu0 0.0
  %426 = vmatprep.subr.mxu0 0.0
  %427 = vmatpush1.msra.mxu0 0.0
  %428 = vmatprep.subr.mxu0 0.0
  %429 = vmatpush1.msra.mxu0 0.0
  %430 = vmatprep.subr.mxu0 0.0
  %431 = vmatpush1.msra.mxu0 0.0
  %432 = vmatprep.mubr.f32.mxu0 0.0
  %v433 = vand.u32 %v42, 4294901760
  %434 = vmatmul.mubr.f32.gmra.mrb[0].mxu0 %v433
  %v435 = vpop.f32.mrb[0].mxu0
  %v436 = vadd.f32 %v358, %v435
  %v437 = vpop.f32.mrb[0].mxu0
  %v438 = vadd.f32 %v360, %v437
  %439 = vdwg.mxu0
  %v440 = vand.u32 %v47, 4294901760
  %441 = vmatprep.subr.mxu0 %v440
  %v442 = vand.u32 %v45, 4294901760
  %443 = vmatpush1.msra.mxu0 %v442
  %444 = vmatprep.subr.mxu0 0.0
  %445 = vmatpush1.msra.mxu0 0.0
  %446 = vmatprep.subr.mxu0 0.0
  %447 = vmatpush1.msra.mxu0 0.0
  %448 = vmatprep.subr.mxu0 0.0
  %449 = vmatpush1.msra.mxu0 0.0
  %450 = vmatprep.subr.mxu0 0.0
  %451 = vmatpush1.msra.mxu0 0.0
  %452 = vmatprep.subr.mxu0 0.0
  %453 = vmatpush1.msra.mxu0 0.0
  %454 = vmatprep.subr.mxu0 0.0
  %455 = vmatpush1.msra.mxu0 0.0
  %456 = vmatprep.subr.mxu0 0.0
  %457 = vmatpush1.msra.mxu0 0.0
  %458 = vmatprep.subr.mxu0 0.0
  %459 = vmatpush1.msra.mxu0 0.0
  %460 = vmatprep.subr.mxu0 0.0
  %461 = vmatpush1.msra.mxu0 0.0
  %462 = vmatprep.subr.mxu0 0.0
  %463 = vmatpush1.msra.mxu0 0.0
  %464 = vmatprep.subr.mxu0 0.0
  %465 = vmatpush1.msra.mxu0 0.0
  %466 = vmatprep.subr.mxu0 0.0
  %467 = vmatpush1.msra.mxu0 0.0
  %468 = vmatprep.subr.mxu0 0.0
  %469 = vmatpush1.msra.mxu0 0.0
  %470 = vmatprep.subr.mxu0 0.0
  %471 = vmatpush1.msra.mxu0 0.0
  %472 = vmatprep.subr.mxu0 0.0
  %473 = vmatpush1.msra.mxu0 0.0
  %474 = vmatprep.subr.mxu0 0.0
  %475 = vmatpush1.msra.mxu0 0.0
  %476 = vmatprep.subr.mxu0 0.0
  %477 = vmatpush1.msra.mxu0 0.0
  %478 = vmatprep.subr.mxu0 0.0
  %479 = vmatpush1.msra.mxu0 0.0
  %480 = vmatprep.subr.mxu0 0.0
  %481 = vmatpush1.msra.mxu0 0.0
  %482 = vmatprep.subr.mxu0 0.0
  %483 = vmatpush1.msra.mxu0 0.0
  %484 = vmatprep.subr.mxu0 0.0
  %485 = vmatpush1.msra.mxu0 0.0
  %486 = vmatprep.subr.mxu0 0.0
  %487 = vmatpush1.msra.mxu0 0.0
  %488 = vmatprep.subr.mxu0 0.0
  %489 = vmatpush1.msra.mxu0 0.0
  %490 = vmatprep.subr.mxu0 0.0
  %491 = vmatpush1.msra.mxu0 0.0
  %492 = vmatprep.subr.mxu0 0.0
  %493 = vmatpush1.msra.mxu0 0.0
  %494 = vmatprep.subr.mxu0 0.0
  %495 = vmatpush1.msra.mxu0 0.0
  %496 = vmatprep.subr.mxu0 0.0
  %497 = vmatpush1.msra.mxu0 0.0
  %498 = vmatprep.subr.mxu0 0.0
  %499 = vmatpush1.msra.mxu0 0.0
  %500 = vmatprep.subr.mxu0 0.0
  %501 = vmatpush1.msra.mxu0 0.0
  %502 = vmatprep.subr.mxu0 0.0
  %503 = vmatpush1.msra.mxu0 0.0
  %504 = vmatprep.subr.mxu0 0.0
  %505 = vmatpush1.msra.mxu0 0.0
  %506 = vmatprep.mubr.f32.mxu0 0.0
  %v507 = vand.u32 %v42, 4294901760
  %508 = vmatmul.mubr.f32.gmra.mrb[0].mxu0 %v507
  %v509 = vpop.f32.mrb[0].mxu0
  %v510 = vadd.f32 %v436, %v509
  %v511 = vpop.f32.mrb[0].mxu0
  %v512 = vadd.f32 %v438, %v511
  %513 = vdwg.mxu0
  %514 = vst [vmem:[%s4] sm:$0xff] %v510
  %515 = vst [vmem:[%s4 + $0x8] sm:$0xff] %v512
  %v516 = vrot.slane %v510, 4
  %v517 = vmax.f32 %v510, %v516
  %v518 = vrot.slane %v517, 2
  %v519 = vmax.f32 %v517, %v518
  %v520 = vrot.slane %v519, 1
  %v521 = vmax.f32 %v519, %v520
  %v522 = vrot.slane %v512, 4
  %v523 = vmax.f32 %v512, %v522
  %v524 = vrot.slane %v523, 2
  %v525 = vmax.f32 %v523, %v524
  %v526 = vrot.slane %v525, 1
  %v527 = vmax.f32 %v525, %v526
  %v528 = vsub.f32 %v510, %v521
  %v529 = vsub.f32 %v512, %v527
  %v530 = vmul.f32 %v528, 1.442695
  %v531 = vpow.pop %v530
  %v532 = vmul.f32 %v529, 1.442695
  %v533 = vpow.pop %v532
  %v534 = vrot.slane %v531, 4
  %v535 = vadd.f32 %v531, %v534
  %v536 = vrot.slane %v535, 2
  %v537 = vadd.f32 %v535, %v536
  %v538 = vrot.slane %v537, 1
  %v539 = vadd.f32 %v537, %v538
  %v540 = vrot.slane %v533, 4
  %v541 = vadd.f32 %v533, %v540
  %v542 = vrot.slane %v541, 2
  %v543 = vadd.f32 %v541, %v542
  %v544 = vrot.slane %v543, 1
  %v545 = vadd.f32 %v543, %v544
  %v546 = vlog2.pop %v539
  %v547 = vmul.f32 %v546, 0.6931472
  %v548 = vlog2.pop %v545
  %v549 = vmul.f32 %v548, 0.6931472
  %v550 = vadd.f32 %v521, %v547
  %v551 = vadd.f32 %v527, %v549
  %v552 = vlaneseq
  %v553 = vshrl.u32 %v552, 7
  %v554 = vlaneseq
  %v555 = vshrl.u32 %v554, 7
  %v556 = vsub.s32 0, %v555
  %v557 = vrot.slane %v32, %v556
  %v558 = vlaneseq
  %v559 = vshrl.u32 %v558, 7
  %v560 = vsub.s32 1, %v559
  %v561 = vrot.slane %v32, %v560
  %vm562 = vcmp.eq.s32.totalorder %v553, %v557
  %vm563 = vcmp.eq.s32.totalorder %v553, %v561
  %v564 = vsel %vm562, %v510, 0.0
  %v565 = vsel %vm563, %v512, 0.0
  %v566 = vrot.slane %v564, 4
  %v567 = vadd.f32 %v564, %v566
  %v568 = vrot.slane %v567, 2
  %v569 = vadd.f32 %v567, %v568
  %v570 = vrot.slane %v569, 1
  %v571 = vadd.f32 %v569, %v570
  %v572 = vrot.slane %v565, 4
  %v573 = vadd.f32 %v565, %v572
  %v574 = vrot.slane %v573, 2
  %v575 = vadd.f32 %v573, %v574
  %v576 = vrot.slane %v575, 1
  %v577 = vadd.f32 %v575, %v576
  %vm578 = vcmp.ne.s32.totalorder %v32, 4294967196
  %v579 = vsel %vm578, 1, 0
  %v580 = vcvt.s32.f32 %v579
  %v581 = vsub.f32 %v550, %v571
  %v582 = vsub.f32 %v551, %v577
  %v584 = vlaneseq
  %v585 = vshrl.u32 %v584, 7
  %v586 = vsub.s32 0, %v585
  %v587 = vrot.slane %v580, %v586
  %v588 = vlaneseq
  %v589 = vshrl.u32 %v588, 7
  %v590 = vsub.s32 1, %v589
  %v591 = vrot.slane %v580, %v590
  %v594 = vmul.f32 %v581, %v587
  %v595 = vmul.f32 %v582, %v591
  %s596 = scalar_lea.vmem %s0, 8
  %v597 = vld [vmem:[%s596] sm:$0xff]
  %s598 = scalar_lea.vmem %s3, 2
  %v599 = vld [vmem:[%s598] sm:$0x3]
  %v601 = vcombine.high %v597, %v597
  %v602 = vsel %vm44, %v597, 0
  %v604 = vsel %vm44, %v601, 0
  %v606 = vand.u32 %v604, 4294901760
  %607 = vmatprep.subr.mxu0 %v606
  %v608 = vand.u32 %v602, 4294901760
  %609 = vmatpush1.msra.mxu0 %v608
  %610 = vmatprep.subr.mxu0 0.0
  %611 = vmatpush1.msra.mxu0 0.0
  %612 = vmatprep.subr.mxu0 0.0
  %613 = vmatpush1.msra.mxu0 0.0
  %614 = vmatprep.subr.mxu0 0.0
  %615 = vmatpush1.msra.mxu0 0.0
  %616 = vmatprep.subr.mxu0 0.0
  %617 = vmatpush1.msra.mxu0 0.0
  %618 = vmatprep.subr.mxu0 0.0
  %619 = vmatpush1.msra.mxu0 0.0
  %620 = vmatprep.subr.mxu0 0.0
  %621 = vmatpush1.msra.mxu0 0.0
  %622 = vmatprep.subr.mxu0 0.0
  %623 = vmatpush1.msra.mxu0 0.0
  %624 = vmatprep.subr.mxu0 0.0
  %625 = vmatpush1.msra.mxu0 0.0
  %626 = vmatprep.subr.mxu0 0.0
  %627 = vmatpush1.msra.mxu0 0.0
  %628 = vmatprep.subr.mxu0 0.0
  %629 = vmatpush1.msra.mxu0 0.0
  %630 = vmatprep.subr.mxu0 0.0
  %631 = vmatpush1.msra.mxu0 0.0
  %632 = vmatprep.subr.mxu0 0.0
  %633 = vmatpush1.msra.mxu0 0.0
  %634 = vmatprep.subr.mxu0 0.0
  %635 = vmatpush1.msra.mxu0 0.0
  %636 = vmatprep.subr.mxu0 0.0
  %637 = vmatpush1.msra.mxu0 0.0
  %638 = vmatprep.subr.mxu0 0.0
  %639 = vmatpush1.msra.mxu0 0.0
  %640 = vmatprep.subr.mxu0 0.0
  %641 = vmatpush1.msra.mxu0 0.0
  %642 = vmatprep.subr.mxu0 0.0
  %643 = vmatpush1.msra.mxu0 0.0
  %644 = vmatprep.subr.mxu0 0.0
  %645 = vmatpush1.msra.mxu0 0.0
  %646 = vmatprep.subr.mxu0 0.0
  %647 = vmatpush1.msra.mxu0 0.0
  %648 = vmatprep.subr.mxu0 0.0
  %649 = vmatpush1.msra.mxu0 0.0
  %650 = vmatprep.subr.mxu0 0.0
  %651 = vmatpush1.msra.mxu0 0.0
  %652 = vmatprep.subr.mxu0 0.0
  %653 = vmatpush1.msra.mxu0 0.0
  %654 = vmatprep.subr.mxu0 0.0
  %655 = vmatpush1.msra.mxu0 0.0
  %656 = vmatprep.subr.mxu0 0.0
  %657 = vmatpush1.msra.mxu0 0.0
  %658 = vmatprep.subr.mxu0 0.0
  %659 = vmatpush1.msra.mxu0 0.0
  %660 = vmatprep.subr.mxu0 0.0
  %661 = vmatpush1.msra.mxu0 0.0
  %662 = vmatprep.subr.mxu0 0.0
  %663 = vmatpush1.msra.mxu0 0.0
  %664 = vmatprep.subr.mxu0 0.0
  %665 = vmatpush1.msra.mxu0 0.0
  %666 = vmatprep.subr.mxu0 0.0
  %667 = vmatpush1.msra.mxu0 0.0
  %668 = vmatprep.subr.mxu0 0.0
  %669 = vmatpush1.msra.mxu0 0.0
  %670 = vmatprep.subr.mxu0 0.0
  %671 = vmatpush1.msra.mxu0 0.0
  %672 = vmatprep.mubr.f32.mxu0 0.0
  %v673 = vand.u32 %v42, 4294901760
  %v674 = vsub.f32 %v42, %v673
  %v675 = vand.u32 %v674, 4294901760
  %v676 = vsub.f32 %v674, %v675
  %v677 = vand.u32 %v676, 4294901760
  %678 = vmatmul.mubr.f32.gmra.mrb[0].mxu0 %v677
  %v679 = vpop.f32.mrb[0].mxu0
  %v680 = vadd.f32 %v36, %v679
  %v681 = vpop.f32.mrb[0].mxu0
  %v682 = vadd.f32 %v36, %v681
  %683 = vdwg.mxu0
  %v684 = vand.u32 %v604, 4294901760
  %v685 = vsub.f32 %v604, %v684
  %v686 = vand.u32 %v685, 4294901760
  %v687 = vsub.f32 %v685, %v686
  %v688 = vand.u32 %v687, 4294901760
  %689 = vmatprep.subr.mxu0 %v688
  %v690 = vand.u32 %v602, 4294901760
  %v691 = vsub.f32 %v602, %v690
  %v692 = vand.u32 %v691, 4294901760
  %v693 = vsub.f32 %v691, %v692
  %v694 = vand.u32 %v693, 4294901760
  %695 = vmatpush1.msra.mxu0 %v694
  %696 = vmatprep.subr.mxu0 0.0
  %697 = vmatpush1.msra.mxu0 0.0
  %698 = vmatprep.subr.mxu0 0.0
  %699 = vmatpush1.msra.mxu0 0.0
  %700 = vmatprep.subr.mxu0 0.0
  %701 = vmatpush1.msra.mxu0 0.0
  %702 = vmatprep.subr.mxu0 0.0
  %703 = vmatpush1.msra.mxu0 0.0
  %704 = vmatprep.subr.mxu0 0.0
  %705 = vmatpush1.msra.mxu0 0.0
  %706 = vmatprep.subr.mxu0 0.0
  %707 = vmatpush1.msra.mxu0 0.0
  %708 = vmatprep.subr.mxu0 0.0
  %709 = vmatpush1.msra.mxu0 0.0
  %710 = vmatprep.subr.mxu0 0.0
  %711 = vmatpush1.msra.mxu0 0.0
  %712 = vmatprep.subr.mxu0 0.0
  %713 = vmatpush1.msra.mxu0 0.0
  %714 = vmatprep.subr.mxu0 0.0
  %715 = vmatpush1.msra.mxu0 0.0
  %716 = vmatprep.subr.mxu0 0.0
  %717 = vmatpush1.msra.mxu0 0.0
  %718 = vmatprep.subr.mxu0 0.0
  %719 = vmatpush1.msra.mxu0 0.0
  %720 = vmatprep.subr.mxu0 0.0
  %721 = vmatpush1.msra.mxu0 0.0
  %722 = vmatprep.subr.mxu0 0.0
  %723 = vmatpush1.msra.mxu0 0.0
  %724 = vmatprep.subr.mxu0 0.0
  %725 = vmatpush1.msra.mxu0 0.0
  %726 = vmatprep.subr.mxu0 0.0
  %727 = vmatpush1.msra.mxu0 0.0
  %728 = vmatprep.subr.mxu0 0.0
  %729 = vmatpush1.msra.mxu0 0.0
  %730 = vmatprep.subr.mxu0 0.0
  %731 = vmatpush1.msra.mxu0 0.0
  %732 = vmatprep.subr.mxu0 0.0
  %733 = vmatpush1.msra.mxu0 0.0
  %734 = vmatprep.subr.mxu0 0.0
  %735 = vmatpush1.msra.mxu0 0.0
  %736 = vmatprep.subr.mxu0 0.0
  %737 = vmatpush1.msra.mxu0 0.0
  %738 = vmatprep.subr.mxu0 0.0
  %739 = vmatpush1.msra.mxu0 0.0
  %740 = vmatprep.subr.mxu0 0.0
  %741 = vmatpush1.msra.mxu0 0.0
  %742 = vmatprep.subr.mxu0 0.0
  %743 = vmatpush1.msra.mxu0 0.0
  %744 = vmatprep.subr.mxu0 0.0
  %745 = vmatpush1.msra.mxu0 0.0
  %746 = vmatprep.subr.mxu0 0.0
  %747 = vmatpush1.msra.mxu0 0.0
  %748 = vmatprep.subr.mxu0 0.0
  %749 = vmatpush1.msra.mxu0 0.0
  %750 = vmatprep.subr.mxu0 0.0
  %751 = vmatpush1.msra.mxu0 0.0
  %752 = vmatprep.subr.mxu0 0.0
  %753 = vmatpush1.msra.mxu0 0.0
  %754 = vmatprep.subr.mxu0 0.0
  %755 = vmatpush1.msra.mxu0 0.0
  %756 = vmatprep.subr.mxu0 0.0
  %757 = vmatpush1.msra.mxu0 0.0
  %758 = vmatprep.mubr.f32.mxu0 0.0
  %v759 = vand.u32 %v42, 4294901760
  %760 = vmatmul.mubr.f32.gmra.mrb[0].mxu0 %v759
  %v761 = vpop.f32.mrb[0].mxu0
  %v762 = vadd.f32 %v680, %v761
  %v763 = vpop.f32.mrb[0].mxu0
  %v764 = vadd.f32 %v682, %v763
  %765 = vdwg.mxu0
  %v766 = vand.u32 %v604, 4294901760
  %v767 = vsub.f32 %v604, %v766
  %768 = vmatprep.subr.mxu0 %v767
  %v769 = vand.u32 %v602, 4294901760
  %v770 = vsub.f32 %v602, %v769
  %771 = vmatpush1.msra.mxu0 %v770
  %772 = vmatprep.subr.mxu0 0.0
  %773 = vmatpush1.msra.mxu0 0.0
  %774 = vmatprep.subr.mxu0 0.0
  %775 = vmatpush1.msra.mxu0 0.0
  %776 = vmatprep.subr.mxu0 0.0
  %777 = vmatpush1.msra.mxu0 0.0
  %778 = vmatprep.subr.mxu0 0.0
  %779 = vmatpush1.msra.mxu0 0.0
  %780 = vmatprep.subr.mxu0 0.0
  %781 = vmatpush1.msra.mxu0 0.0
  %782 = vmatprep.subr.mxu0 0.0
  %783 = vmatpush1.msra.mxu0 0.0
  %784 = vmatprep.subr.mxu0 0.0
  %785 = vmatpush1.msra.mxu0 0.0
  %786 = vmatprep.subr.mxu0 0.0
  %787 = vmatpush1.msra.mxu0 0.0
  %788 = vmatprep.subr.mxu0 0.0
  %789 = vmatpush1.msra.mxu0 0.0
  %790 = vmatprep.subr.mxu0 0.0
  %791 = vmatpush1.msra.mxu0 0.0
  %792 = vmatprep.subr.mxu0 0.0
  %793 = vmatpush1.msra.mxu0 0.0
  %794 = vmatprep.subr.mxu0 0.0
  %795 = vmatpush1.msra.mxu0 0.0
  %796 = vmatprep.subr.mxu0 0.0
  %797 = vmatpush1.msra.mxu0 0.0
  %798 = vmatprep.subr.mxu0 0.0
  %799 = vmatpush1.msra.mxu0 0.0
  %800 = vmatprep.subr.mxu0 0.0
  %801 = vmatpush1.msra.mxu0 0.0
  %802 = vmatprep.subr.mxu0 0.0
  %803 = vmatpush1.msra.mxu0 0.0
  %804 = vmatprep.subr.mxu0 0.0
  %805 = vmatpush1.msra.mxu0 0.0
  %806 = vmatprep.subr.mxu0 0.0
  %807 = vmatpush1.msra.mxu0 0.0
  %808 = vmatprep.subr.mxu0 0.0
  %809 = vmatpush1.msra.mxu0 0.0
  %810 = vmatprep.subr.mxu0 0.0
  %811 = vmatpush1.msra.mxu0 0.0
  %812 = vmatprep.subr.mxu0 0.0
  %813 = vmatpush1.msra.mxu0 0.0
  %814 = vmatprep.subr.mxu0 0.0
  %815 = vmatpush1.msra.mxu0 0.0
  %816 = vmatprep.subr.mxu0 0.0
  %817 = vmatpush1.msra.mxu0 0.0
  %818 = vmatprep.subr.mxu0 0.0
  %819 = vmatpush1.msra.mxu0 0.0
  %820 = vmatprep.subr.mxu0 0.0
  %821 = vmatpush1.msra.mxu0 0.0
  %822 = vmatprep.subr.mxu0 0.0
  %823 = vmatpush1.msra.mxu0 0.0
  %824 = vmatprep.subr.mxu0 0.0
  %825 = vmatpush1.msra.mxu0 0.0
  %826 = vmatprep.subr.mxu0 0.0
  %827 = vmatpush1.msra.mxu0 0.0
  %828 = vmatprep.subr.mxu0 0.0
  %829 = vmatpush1.msra.mxu0 0.0
  %830 = vmatprep.subr.mxu0 0.0
  %831 = vmatpush1.msra.mxu0 0.0
  %832 = vmatprep.subr.mxu0 0.0
  %833 = vmatpush1.msra.mxu0 0.0
  %834 = vmatprep.mubr.f32.mxu0 0.0
  %v835 = vand.u32 %v42, 4294901760
  %v836 = vsub.f32 %v42, %v835
  %837 = vmatmul.mubr.f32.gmra.mrb[0].mxu0 %v836
  %v838 = vpop.f32.mrb[0].mxu0
  %v839 = vadd.f32 %v762, %v838
  %v840 = vpop.f32.mrb[0].mxu0
  %v841 = vadd.f32 %v764, %v840
  %842 = vdwg.mxu0
  %v843 = vand.u32 %v604, 4294901760
  %844 = vmatprep.subr.mxu0 %v843
  %v845 = vand.u32 %v602, 4294901760
  %846 = vmatpush1.msra.mxu0 %v845
  %847 = vmatprep.subr.mxu0 0.0
  %848 = vmatpush1.msra.mxu0 0.0
  %849 = vmatprep.subr.mxu0 0.0
  %850 = vmatpush1.msra.mxu0 0.0
  %851 = vmatprep.subr.mxu0 0.0
  %852 = vmatpush1.msra.mxu0 0.0
  %853 = vmatprep.subr.mxu0 0.0
  %854 = vmatpush1.msra.mxu0 0.0
  %855 = vmatprep.subr.mxu0 0.0
  %856 = vmatpush1.msra.mxu0 0.0
  %857 = vmatprep.subr.mxu0 0.0
  %858 = vmatpush1.msra.mxu0 0.0
  %859 = vmatprep.subr.mxu0 0.0
  %860 = vmatpush1.msra.mxu0 0.0
  %861 = vmatprep.subr.mxu0 0.0
  %862 = vmatpush1.msra.mxu0 0.0
  %863 = vmatprep.subr.mxu0 0.0
  %864 = vmatpush1.msra.mxu0 0.0
  %865 = vmatprep.subr.mxu0 0.0
  %866 = vmatpush1.msra.mxu0 0.0
  %867 = vmatprep.subr.mxu0 0.0
  %868 = vmatpush1.msra.mxu0 0.0
  %869 = vmatprep.subr.mxu0 0.0
  %870 = vmatpush1.msra.mxu0 0.0
  %871 = vmatprep.subr.mxu0 0.0
  %872 = vmatpush1.msra.mxu0 0.0
  %873 = vmatprep.subr.mxu0 0.0
  %874 = vmatpush1.msra.mxu0 0.0
  %875 = vmatprep.subr.mxu0 0.0
  %876 = vmatpush1.msra.mxu0 0.0
  %877 = vmatprep.subr.mxu0 0.0
  %878 = vmatpush1.msra.mxu0 0.0
  %879 = vmatprep.subr.mxu0 0.0
  %880 = vmatpush1.msra.mxu0 0.0
  %881 = vmatprep.subr.mxu0 0.0
  %882 = vmatpush1.msra.mxu0 0.0
  %883 = vmatprep.subr.mxu0 0.0
  %884 = vmatpush1.msra.mxu0 0.0
  %885 = vmatprep.subr.mxu0 0.0
  %886 = vmatpush1.msra.mxu0 0.0
  %887 = vmatprep.subr.mxu0 0.0
  %888 = vmatpush1.msra.mxu0 0.0
  %889 = vmatprep.subr.mxu0 0.0
  %890 = vmatpush1.msra.mxu0 0.0
  %891 = vmatprep.subr.mxu0 0.0
  %892 = vmatpush1.msra.mxu0 0.0
  %893 = vmatprep.subr.mxu0 0.0
  %894 = vmatpush1.msra.mxu0 0.0
  %895 = vmatprep.subr.mxu0 0.0
  %896 = vmatpush1.msra.mxu0 0.0
  %897 = vmatprep.subr.mxu0 0.0
  %898 = vmatpush1.msra.mxu0 0.0
  %899 = vmatprep.subr.mxu0 0.0
  %900 = vmatpush1.msra.mxu0 0.0
  %901 = vmatprep.subr.mxu0 0.0
  %902 = vmatpush1.msra.mxu0 0.0
  %903 = vmatprep.subr.mxu0 0.0
  %904 = vmatpush1.msra.mxu0 0.0
  %905 = vmatprep.subr.mxu0 0.0
  %906 = vmatpush1.msra.mxu0 0.0
  %907 = vmatprep.subr.mxu0 0.0
  %908 = vmatpush1.msra.mxu0 0.0
  %909 = vmatprep.mubr.f32.mxu0 0.0
  %v910 = vand.u32 %v42, 4294901760
  %v911 = vsub.f32 %v42, %v910
  %v912 = vand.u32 %v911, 4294901760
  %913 = vmatmul.mubr.f32.gmra.mrb[0].mxu0 %v912
  %v914 = vpop.f32.mrb[0].mxu0
  %v915 = vadd.f32 %v839, %v914
  %v916 = vpop.f32.mrb[0].mxu0
  %v917 = vadd.f32 %v841, %v916
  %918 = vdwg.mxu0
  %v919 = vand.u32 %v604, 4294901760
  %v920 = vsub.f32 %v604, %v919
  %v921 = vand.u32 %v920, 4294901760
  %922 = vmatprep.subr.mxu0 %v921
  %v923 = vand.u32 %v602, 4294901760
  %v924 = vsub.f32 %v602, %v923
  %v925 = vand.u32 %v924, 4294901760
  %926 = vmatpush1.msra.mxu0 %v925
  %927 = vmatprep.subr.mxu0 0.0
  %928 = vmatpush1.msra.mxu0 0.0
  %929 = vmatprep.subr.mxu0 0.0
  %930 = vmatpush1.msra.mxu0 0.0
  %931 = vmatprep.subr.mxu0 0.0
  %932 = vmatpush1.msra.mxu0 0.0
  %933 = vmatprep.subr.mxu0 0.0
  %934 = vmatpush1.msra.mxu0 0.0
  %935 = vmatprep.subr.mxu0 0.0
  %936 = vmatpush1.msra.mxu0 0.0
  %937 = vmatprep.subr.mxu0 0.0
  %938 = vmatpush1.msra.mxu0 0.0
  %939 = vmatprep.subr.mxu0 0.0
  %940 = vmatpush1.msra.mxu0 0.0
  %941 = vmatprep.subr.mxu0 0.0
  %942 = vmatpush1.msra.mxu0 0.0
  %943 = vmatprep.subr.mxu0 0.0
  %944 = vmatpush1.msra.mxu0 0.0
  %945 = vmatprep.subr.mxu0 0.0
  %946 = vmatpush1.msra.mxu0 0.0
  %947 = vmatprep.subr.mxu0 0.0
  %948 = vmatpush1.msra.mxu0 0.0
  %949 = vmatprep.subr.mxu0 0.0
  %950 = vmatpush1.msra.mxu0 0.0
  %951 = vmatprep.subr.mxu0 0.0
  %952 = vmatpush1.msra.mxu0 0.0
  %953 = vmatprep.subr.mxu0 0.0
  %954 = vmatpush1.msra.mxu0 0.0
  %955 = vmatprep.subr.mxu0 0.0
  %956 = vmatpush1.msra.mxu0 0.0
  %957 = vmatprep.subr.mxu0 0.0
  %958 = vmatpush1.msra.mxu0 0.0
  %959 = vmatprep.subr.mxu0 0.0
  %960 = vmatpush1.msra.mxu0 0.0
  %961 = vmatprep.subr.mxu0 0.0
  %962 = vmatpush1.msra.mxu0 0.0
  %963 = vmatprep.subr.mxu0 0.0
  %964 = vmatpush1.msra.mxu0 0.0
  %965 = vmatprep.subr.mxu0 0.0
  %966 = vmatpush1.msra.mxu0 0.0
  %967 = vmatprep.subr.mxu0 0.0
  %968 = vmatpush1.msra.mxu0 0.0
  %969 = vmatprep.subr.mxu0 0.0
  %970 = vmatpush1.msra.mxu0 0.0
  %971 = vmatprep.subr.mxu0 0.0
  %972 = vmatpush1.msra.mxu0 0.0
  %973 = vmatprep.subr.mxu0 0.0
  %974 = vmatpush1.msra.mxu0 0.0
  %975 = vmatprep.subr.mxu0 0.0
  %976 = vmatpush1.msra.mxu0 0.0
  %977 = vmatprep.subr.mxu0 0.0
  %978 = vmatpush1.msra.mxu0 0.0
  %979 = vmatprep.subr.mxu0 0.0
  %980 = vmatpush1.msra.mxu0 0.0
  %981 = vmatprep.subr.mxu0 0.0
  %982 = vmatpush1.msra.mxu0 0.0
  %983 = vmatprep.subr.mxu0 0.0
  %984 = vmatpush1.msra.mxu0 0.0
  %985 = vmatprep.subr.mxu0 0.0
  %986 = vmatpush1.msra.mxu0 0.0
  %987 = vmatprep.subr.mxu0 0.0
  %988 = vmatpush1.msra.mxu0 0.0
  %989 = vmatprep.mubr.f32.mxu0 0.0
  %v990 = vand.u32 %v42, 4294901760
  %991 = vmatmul.mubr.f32.gmra.mrb[0].mxu0 %v990
  %v992 = vpop.f32.mrb[0].mxu0
  %v993 = vadd.f32 %v915, %v992
  %v994 = vpop.f32.mrb[0].mxu0
  %v995 = vadd.f32 %v917, %v994
  %996 = vdwg.mxu0
  %v997 = vand.u32 %v604, 4294901760
  %998 = vmatprep.subr.mxu0 %v997
  %v999 = vand.u32 %v602, 4294901760
  %1000 = vmatpush1.msra.mxu0 %v999
  %1001 = vmatprep.subr.mxu0 0.0
  %1002 = vmatpush1.msra.mxu0 0.0
  %1003 = vmatprep.subr.mxu0 0.0
  %1004 = vmatpush1.msra.mxu0 0.0
  %1005 = vmatprep.subr.mxu0 0.0
  %1006 = vmatpush1.msra.mxu0 0.0
  %1007 = vmatprep.subr.mxu0 0.0
  %1008 = vmatpush1.msra.mxu0 0.0
  %1009 = vmatprep.subr.mxu0 0.0
  %1010 = vmatpush1.msra.mxu0 0.0
  %1011 = vmatprep.subr.mxu0 0.0
  %1012 = vmatpush1.msra.mxu0 0.0
  %1013 = vmatprep.subr.mxu0 0.0
  %1014 = vmatpush1.msra.mxu0 0.0
  %1015 = vmatprep.subr.mxu0 0.0
  %1016 = vmatpush1.msra.mxu0 0.0
  %1017 = vmatprep.subr.mxu0 0.0
  %1018 = vmatpush1.msra.mxu0 0.0
  %1019 = vmatprep.subr.mxu0 0.0
  %1020 = vmatpush1.msra.mxu0 0.0
  %1021 = vmatprep.subr.mxu0 0.0
  %1022 = vmatpush1.msra.mxu0 0.0
  %1023 = vmatprep.subr.mxu0 0.0
  %1024 = vmatpush1.msra.mxu0 0.0
  %1025 = vmatprep.subr.mxu0 0.0
  %1026 = vmatpush1.msra.mxu0 0.0
  %1027 = vmatprep.subr.mxu0 0.0
  %1028 = vmatpush1.msra.mxu0 0.0
  %1029 = vmatprep.subr.mxu0 0.0
  %1030 = vmatpush1.msra.mxu0 0.0
  %1031 = vmatprep.subr.mxu0 0.0
  %1032 = vmatpush1.msra.mxu0 0.0
  %1033 = vmatprep.subr.mxu0 0.0
  %1034 = vmatpush1.msra.mxu0 0.0
  %1035 = vmatprep.subr.mxu0 0.0
  %1036 = vmatpush1.msra.mxu0 0.0
  %1037 = vmatprep.subr.mxu0 0.0
  %1038 = vmatpush1.msra.mxu0 0.0
  %1039 = vmatprep.subr.mxu0 0.0
  %1040 = vmatpush1.msra.mxu0 0.0
  %1041 = vmatprep.subr.mxu0 0.0
  %1042 = vmatpush1.msra.mxu0 0.0
  %1043 = vmatprep.subr.mxu0 0.0
  %1044 = vmatpush1.msra.mxu0 0.0
  %1045 = vmatprep.subr.mxu0 0.0
  %1046 = vmatpush1.msra.mxu0 0.0
  %1047 = vmatprep.subr.mxu0 0.0
  %1048 = vmatpush1.msra.mxu0 0.0
  %1049 = vmatprep.subr.mxu0 0.0
  %1050 = vmatpush1.msra.mxu0 0.0
  %1051 = vmatprep.subr.mxu0 0.0
  %1052 = vmatpush1.msra.mxu0 0.0
  %1053 = vmatprep.subr.mxu0 0.0
  %1054 = vmatpush1.msra.mxu0 0.0
  %1055 = vmatprep.subr.mxu0 0.0
  %1056 = vmatpush1.msra.mxu0 0.0
  %1057 = vmatprep.subr.mxu0 0.0
  %1058 = vmatpush1.msra.mxu0 0.0
  %1059 = vmatprep.subr.mxu0 0.0
  %1060 = vmatpush1.msra.mxu0 0.0
  %1061 = vmatprep.subr.mxu0 0.0
  %1062 = vmatpush1.msra.mxu0 0.0
  %1063 = vmatprep.mubr.f32.mxu0 0.0
  %v1064 = vand.u32 %v42, 4294901760
  %1065 = vmatmul.mubr.f32.gmra.mrb[0].mxu0 %v1064
  %v1066 = vpop.f32.mrb[0].mxu0
  %v1067 = vadd.f32 %v993, %v1066
  %v1068 = vpop.f32.mrb[0].mxu0
  %v1069 = vadd.f32 %v995, %v1068
  %1070 = vdwg.mxu0
  %s1071 = scalar_lea.vmem %s4, 16
  %1072 = vst [vmem:[%s1071] sm:$0xff] %v1067
  %1073 = vst [vmem:[%s1071 + $0x8] sm:$0xff] %v1069
  %v1074 = vrot.slane %v1067, 4
  %v1075 = vmax.f32 %v1067, %v1074
  %v1076 = vrot.slane %v1075, 2
  %v1077 = vmax.f32 %v1075, %v1076
  %v1078 = vrot.slane %v1077, 1
  %v1079 = vmax.f32 %v1077, %v1078
  %v1080 = vrot.slane %v1069, 4
  %v1081 = vmax.f32 %v1069, %v1080
  %v1082 = vrot.slane %v1081, 2
  %v1083 = vmax.f32 %v1081, %v1082
  %v1084 = vrot.slane %v1083, 1
  %v1085 = vmax.f32 %v1083, %v1084
  %v1086 = vsub.f32 %v1067, %v1079
  %v1087 = vsub.f32 %v1069, %v1085
  %v1088 = vmul.f32 %v1086, 1.442695
  %v1089 = vpow.pop %v1088
  %v1090 = vmul.f32 %v1087, 1.442695
  %v1091 = vpow.pop %v1090
  %v1092 = vrot.slane %v1089, 4
  %v1093 = vadd.f32 %v1089, %v1092
  %v1094 = vrot.slane %v1093, 2
  %v1095 = vadd.f32 %v1093, %v1094
  %v1096 = vrot.slane %v1095, 1
  %v1097 = vadd.f32 %v1095, %v1096
  %v1098 = vrot.slane %v1091, 4
  %v1099 = vadd.f32 %v1091, %v1098
  %v1100 = vrot.slane %v1099, 2
  %v1101 = vadd.f32 %v1099, %v1100
  %v1102 = vrot.slane %v1101, 1
  %v1103 = vadd.f32 %v1101, %v1102
  %v1104 = vlog2.pop %v1097
  %v1105 = vmul.f32 %v1104, 0.6931472
  %v1106 = vlog2.pop %v1103
  %v1107 = vmul.f32 %v1106, 0.6931472
  %v1108 = vadd.f32 %v1079, %v1105
  %v1109 = vadd.f32 %v1085, %v1107
  %v1110 = vlaneseq
  %v1111 = vshrl.u32 %v1110, 7
  %v1112 = vsub.s32 0, %v1111
  %v1113 = vrot.slane %v599, %v1112
  %v1114 = vlaneseq
  %v1115 = vshrl.u32 %v1114, 7
  %v1116 = vsub.s32 1, %v1115
  %v1117 = vrot.slane %v599, %v1116
  %vm1118 = vcmp.eq.s32.totalorder %v553, %v1113
  %vm1119 = vcmp.eq.s32.totalorder %v553, %v1117
  %v1120 = vsel %vm1118, %v1067, 0.0
  %v1121 = vsel %vm1119, %v1069, 0.0
  %v1122 = vrot.slane %v1120, 4
  %v1123 = vadd.f32 %v1120, %v1122
  %v1124 = vrot.slane %v1123, 2
  %v1125 = vadd.f32 %v1123, %v1124
  %v1126 = vrot.slane %v1125, 1
  %v1127 = vadd.f32 %v1125, %v1126
  %v1128 = vrot.slane %v1121, 4
  %v1129 = vadd.f32 %v1121, %v1128
  %v1130 = vrot.slane %v1129, 2
  %v1131 = vadd.f32 %v1129, %v1130
  %v1132 = vrot.slane %v1131, 1
  %v1133 = vadd.f32 %v1131, %v1132
  %vm1134 = vcmp.ne.s32.totalorder %v599, 4294967196
  %v1135 = vsel %vm1134, 1, 0
  %v1136 = vcvt.s32.f32 %v1135
  %v1137 = vsub.f32 %v1108, %v1127
  %v1138 = vsub.f32 %v1109, %v1133
  %v1140 = vlaneseq
  %v1141 = vshrl.u32 %v1140, 7
  %v1142 = vsub.s32 0, %v1141
  %v1143 = vrot.slane %v1136, %v1142
  %v1144 = vlaneseq
  %v1145 = vshrl.u32 %v1144, 7
  %v1146 = vsub.s32 1, %v1145
  %v1147 = vrot.slane %v1136, %v1146
  %v1150 = vmul.f32 %v1137, %v1143
  %v1151 = vmul.f32 %v1138, %v1147
  %v1152 = vadd.f32 %v594, %v1150
  %v1153 = vadd.f32 %v595, %v1151
  %v1154 = vadd.f32 %v580, %v1136
  %v1155 = vld [vmem:[#allocation2] sm:$0x3]
  %v1158 = vcombine.low %v1152, %v1153
  %v1160 = vunpack.c.l.s4 1966171168
  %v1161 = vunpack.c.0.s8 %v1160
  %v1162 = vlaneseq
  %v1163 = vshrl.u32 %v1162, 7
  %v1164 = vsub.s32 %v1161, %v1163
  %v1165 = vrot.slane %v1158, %v1164
  %v1167 = vunpack.c.l.s4 1966171168
  %v1168 = vunpack.c.0.s8 %v1167
  %v1169 = vlaneseq
  %v1170 = vshrl.u32 %v1169, 7
  %v1171 = vsub.s32 %v1168, %v1170
  %v1172 = vrot.slane %v1165, %v1171
  %v1174 = vadd.f32 %v1155, %v1172
  %v1175 = vlaneseq
  %vm1176 = vcmp.ge.s32.totalorder %v1175, 0
  %vm1177 = vcmp.lt.s32.totalorder %v1175, 256
  %vm1178 = vmand %vm1176, %vm1177
  %1179 = vst.msk [vmem:[#allocation2] sm:$0x3] %vm1178, %v1174
  %v1180 = vld [vmem:[#allocation3] sm:$0x3]
  %v1181 = vadd.f32 %v1180, %v1154
  %1182 = vst.msk [vmem:[#allocation3] sm:$0x3] %vm1178, %v1181
  // Predicated region
  $region22: #{full_model_forward.1} parent=0 // pred_check
    %p1183 = pneg %p19
  $region23: #{full_model_forward.1} parent=0 // pred_check_branch
    %1185 = sbr.rel (%p1183) target = $region25
  $region24: #{full_model_forward.1} parent=0 // pred_region
    %v1186 = vld [vmem:[#allocation2] sm:$0x3]
    %v1188 = vlaneseq
    %v1189 = vshrl.u32 %v1188, 7
    %v1190 = vsub.s32 0, %v1189
    %v1191 = vrot.slane %v1186, %v1190
    %v1192 = vlaneseq
    %v1193 = vshrl.u32 %v1192, 7
    %v1194 = vsub.s32 1, %v1193
    %v1195 = vrot.slane %v1186, %v1194
    %vm1198 = vcmask 1040384
    %v1199 = vsel %vm1198, %v1191, 0.0
    %v1200 = vsel %vm1198, %v1195, 0.0
    %v1201 = vadd.f32 %v1199, %v1200
    %1202 = vadd.xlane.f32.xlu0 %v1201
    %v1203 = vpop.xlane.xlu0 %1202
    %v1204 = vrot.slane %v1203, 4
    %v1205 = vadd.f32 %v1203, %v1204
    %v1206 = vrot.slane %v1205, 2
    %v1207 = vadd.f32 %v1205, %v1206
    %v1208 = vrot.slane %v1207, 1
    %v1209 = vadd.f32 %v1207, %v1208
    %s1210 = vtos %v1209
    %v1211 = vld [vmem:[#allocation3] sm:$0x3]
    %v1213 = vlaneseq
    %v1214 = vshrl.u32 %v1213, 7
    %v1215 = vsub.s32 0, %v1214
    %v1216 = vrot.slane %v1211, %v1215
    %v1217 = vlaneseq
    %v1218 = vshrl.u32 %v1217, 7
    %v1219 = vsub.s32 1, %v1218
    %v1220 = vrot.slane %v1211, %v1219
    %v1223 = vsel %vm1198, %v1216, 0.0
    %v1224 = vsel %vm1198, %v1220, 0.0
    %v1225 = vadd.f32 %v1223, %v1224
    %1226 = vadd.xlane.f32.xlu0 %v1225
    %v1227 = vpop.xlane.xlu0 %1226
    %v1228 = vrot.slane %v1227, 4
    %v1229 = vadd.f32 %v1227, %v1228
    %v1230 = vrot.slane %v1229, 2
    %v1231 = vadd.f32 %v1229, %v1230
    %v1232 = vrot.slane %v1231, 1
    %v1233 = vadd.f32 %v1231, %v1232
    %s1234 = vtos %v1233
    %v1235 = vstv %s1210
    %1236 = vst [vmem:[%s5] sm:$0x1] %v1235
    %v1237 = vstv %s1234
    %1238 = vst [vmem:[%s5 + $0x1] sm:$0x1] %v1237
  $region25: #{full_model_forward.1} parent=0 // pred_fallthru
    _
  // Predicated region
  $region26: #{full_model_forward.1} parent=0 // pred_check
    _
  $region27: #{full_model_forward.1} parent=0 // pred_check_branch
    %1240 = sbr.rel (0) target = $region29
  $region28: #{full_model_forward.1} parent=0 // pred_region
    _
  $region29: #{full_model_forward.1} parent=0 // pred_fallthru
    _
  // Predicated region
  $region30: #{full_model_forward.1} parent=0 // pred_check
    _
  $region31: #{full_model_forward.1} parent=0 // pred_check_branch
    %1242 = sbr.rel (0) target = $region33
  $region32: #{full_model_forward.1} parent=0 // pred_region
    _
  $region33: #{full_model_forward.1} parent=0 // pred_fallthru
    _
  // Predicated region
  $region34: #{full_model_forward.1} parent=0 // pred_check
    _
  $region35: #{full_model_forward.1} parent=0 // pred_check_branch
    %1244 = sbr.rel (0) target = $region37
  $region36: #{full_model_forward.1} parent=0 // pred_region
    _
  $region37: #{full_model_forward.1} parent=0 // pred_fallthru
    _
  // Predicated region
  $region38: #{full_model_forward.1} parent=0 // pred_check
    _
  $region39: #{full_model_forward.1} parent=0 // pred_check_branch
    %1246 = sbr.rel (0) target = $region41
  $region40: #{full_model_forward.1} parent=0 // pred_region
    _
  $region41: #{full_model_forward.1} parent=0 // pred_fallthru
    _

</llo_original>
